<compile_context>
chip_gen: v6e
topology: v6e:2x2x1
jax: 0.10.0
libtpu: 0.0.40
codegen_flags: <defaults>
</compile_context>

<pallas_src>
import jax
import jax.numpy as jnp
from jax.experimental import pallas as pl
from jax.experimental.pallas import tpu as pltpu


# Slab layout (single (8,128) f32 VMEM tile holding every parameter):
#   rows 0:3, cols 0:3   -> param1            [3, 3]
#   rows 0:3, cols 8:12  -> Linear weight^T   [3, 4]  ([in, out], pre-transposed)
#   row  3,   cols 0:4   -> Linear bias       [4]
_SLAB_SHAPE = (8, 128)


def _pack_param_slab(param1, lin_w, lin_b):
    slab = jnp.zeros(_SLAB_SHAPE, jnp.float32)
    slab = slab.at[0:3, 0:3].set(param1.astype(jnp.float32))
    slab = slab.at[0:3, 8:12].set(jnp.transpose(lin_w).astype(jnp.float32))
    slab = slab.at[3, 0:4].set(lin_b.astype(jnp.float32))
    return slab


# ----------------------------------------------------------------------------
# Fused kernel:  out = (param1 @ x) @ W^T + b
#   slab: (8,128) packed parameters      x: [3,3]      out: [3,4]
# Both contractions are unrolled k=3 VPU broadcast-FMA chains (no MXU).
# ----------------------------------------------------------------------------
def net_fwd_kernel(slab_ref, x_ref, o_ref):
    slab = slab_ref[...]                      # single VMEM tile, one load
    x = x_ref[...].astype(jnp.float32)        # [3, 3]

    p = slab[0:3, 0:3]                        # [3, 3]
    w = slab[0:3, 8:12]                       # [3, 4]  (already [in, out])
    b = slab[3:4, 0:4]                        # [1, 4]

    # h = param1 @ x  : h[i, j] = sum_k p[i, k] * x[k, j]   (VPU, unrolled k=3)
    h = (p[:, 0:1] * x[0:1, :]
         + p[:, 1:2] * x[1:2, :]
         + p[:, 2:3] * x[2:3, :])             # [3, 3]

    # y = h @ W^T + b : y[i, j] = sum_k h[i, k] * w[k, j] + b[j]
    y = (h[:, 0:1] * w[0:1, :]
         + h[:, 1:2] * w[1:2, :]
         + h[:, 2:3] * w[2:3, :]) + b         # [3, 4]

    o_ref[...] = y.astype(o_ref.dtype)


def net_forward_pallas(param_slab, x):
    m, k = 3, 3
    out_f = 4
    itemsize = jnp.dtype(x.dtype).itemsize
    bytes_accessed = (param_slab.size * 4            # packed slab
                      + x.size * itemsize            # input
                      + m * out_f * itemsize)        # output
    flops = 2 * m * k * k + 2 * m * k * out_f + m * out_f  # both mms + bias add
    vmem_spec = pl.BlockSpec(memory_space=pltpu.MemorySpace.VMEM)
    return pl.pallas_call(
        net_fwd_kernel,
        out_shape=jax.ShapeDtypeStruct((m, out_f), x.dtype),
        in_specs=[vmem_spec, vmem_spec],
        out_specs=vmem_spec,
        cost_estimate=pl.CostEstimate(
            flops=flops, transcendentals=0, bytes_accessed=bytes_accessed),
    )(param_slab, x)


# ----------------------------------------------------------------------------
# Parameter init (deterministic, PyTorch-style) + jitted forward
# ----------------------------------------------------------------------------
def init_params(key):
    k1, k2, k3 = jax.random.split(key, 3)
    # nn.Parameter(t.randn(3, 3))
    param1 = jax.random.normal(k1, (3, 3), jnp.float32)
    # nn.Linear(3, 4): uniform(-1/sqrt(fan_in), 1/sqrt(fan_in)), fan_in = 3.
    bound = 1.0 / jnp.sqrt(3.0)
    lin_w = jax.random.uniform(k2, (4, 3), jnp.float32, -bound, bound)
    lin_b = jax.random.uniform(k3, (4,), jnp.float32, -bound, bound)
    # Keep raw params (for the reference check) plus the packed kernel slab.
    return dict(param1=param1,
                lin_w=lin_w,
                lin_b=lin_b,
                slab=_pack_param_slab(param1, lin_w, lin_b))


@jax.jit
def net_forward(params, x):
    return net_forward_pallas(params["slab"], x)


def _reference(params, x):
    h = params["param1"] @ x                                   # [3, 3]
    return h @ jnp.transpose(params["lin_w"]) + params["lin_b"]  # [3, 4]


if __name__ == "__main__":
    key = jax.random.PRNGKey(0)
    kp, kx = jax.random.split(key, 2)
    params = init_params(kp)

    # forward does param1.mm(input) followed by Linear(3,4), which forces the
    # input to be exactly [3, 3].
    x = jax.random.normal(kx, (3, 3), jnp.float32)

    out = net_forward(params, x)
    jax.block_until_ready(out)

    ref = _reference(params, x)
    assert out.shape == (3, 4)
    assert jnp.allclose(out, ref, atol=1e-4, rtol=1e-4)

    print("KERNEL_OK")
</pallas_src>

<mosaic_0001>
module attributes {stable_mosaic.version = 11 : i64} {
  func.func @net_fwd_kernel(%arg0: memref<8x128xf32, #tpu.memory_space<vmem>>, %arg1: memref<3x3xf32, #tpu.memory_space<vmem>>, %arg2: memref<3x4xf32, #tpu.memory_space<vmem>>) attributes {dimension_semantics = [], scalar_prefetch = 0 : i64, scratch_operands = 0 : i64, tpu.core_type = #tpu.core_type<tc>} {
    %c0 = arith.constant 0 : index
    %c0_0 = arith.constant 0 : index
    %0 = vector.load %arg0[%c0, %c0_0] : memref<8x128xf32, #tpu.memory_space<vmem>>, vector<8x128xf32>
    %c0_1 = arith.constant 0 : index
    %c0_2 = arith.constant 0 : index
    %1 = vector.load %arg1[%c0_1, %c0_2] : memref<3x3xf32, #tpu.memory_space<vmem>>, vector<3x3xf32>
    %2 = vector.extract_strided_slice %0 {offsets = [0, 0], sizes = [3, 3], strides = [1, 1]} : vector<8x128xf32> to vector<3x3xf32>
    %3 = vector.extract_strided_slice %0 {offsets = [0, 8], sizes = [3, 4], strides = [1, 1]} : vector<8x128xf32> to vector<3x4xf32>
    %4 = vector.extract_strided_slice %0 {offsets = [3, 0], sizes = [1, 4], strides = [1, 1]} : vector<8x128xf32> to vector<1x4xf32>
    %5 = vector.extract_strided_slice %2 {offsets = [0, 0], sizes = [3, 1], strides = [1, 1]} : vector<3x3xf32> to vector<3x1xf32>
    %6 = vector.extract_strided_slice %1 {offsets = [0, 0], sizes = [1, 3], strides = [1, 1]} : vector<3x3xf32> to vector<1x3xf32>
    %7 = vector.broadcast %5 : vector<3x1xf32> to vector<3x3xf32>
    %8 = vector.broadcast %6 : vector<1x3xf32> to vector<3x3xf32>
    %9 = arith.mulf %7, %8 : vector<3x3xf32>
    %10 = vector.extract_strided_slice %2 {offsets = [0, 1], sizes = [3, 1], strides = [1, 1]} : vector<3x3xf32> to vector<3x1xf32>
    %11 = vector.extract_strided_slice %1 {offsets = [1, 0], sizes = [1, 3], strides = [1, 1]} : vector<3x3xf32> to vector<1x3xf32>
    %12 = vector.broadcast %10 : vector<3x1xf32> to vector<3x3xf32>
    %13 = vector.broadcast %11 : vector<1x3xf32> to vector<3x3xf32>
    %14 = arith.mulf %12, %13 : vector<3x3xf32>
    %15 = arith.addf %9, %14 : vector<3x3xf32>
    %16 = vector.extract_strided_slice %2 {offsets = [0, 2], sizes = [3, 1], strides = [1, 1]} : vector<3x3xf32> to vector<3x1xf32>
    %17 = vector.extract_strided_slice %1 {offsets = [2, 0], sizes = [1, 3], strides = [1, 1]} : vector<3x3xf32> to vector<1x3xf32>
    %18 = vector.broadcast %16 : vector<3x1xf32> to vector<3x3xf32>
    %19 = vector.broadcast %17 : vector<1x3xf32> to vector<3x3xf32>
    %20 = arith.mulf %18, %19 : vector<3x3xf32>
    %21 = arith.addf %15, %20 : vector<3x3xf32>
    %22 = vector.extract_strided_slice %21 {offsets = [0, 0], sizes = [3, 1], strides = [1, 1]} : vector<3x3xf32> to vector<3x1xf32>
    %23 = vector.extract_strided_slice %3 {offsets = [0, 0], sizes = [1, 4], strides = [1, 1]} : vector<3x4xf32> to vector<1x4xf32>
    %24 = vector.broadcast %22 : vector<3x1xf32> to vector<3x4xf32>
    %25 = vector.broadcast %23 : vector<1x4xf32> to vector<3x4xf32>
    %26 = arith.mulf %24, %25 : vector<3x4xf32>
    %27 = vector.extract_strided_slice %21 {offsets = [0, 1], sizes = [3, 1], strides = [1, 1]} : vector<3x3xf32> to vector<3x1xf32>
    %28 = vector.extract_strided_slice %3 {offsets = [1, 0], sizes = [1, 4], strides = [1, 1]} : vector<3x4xf32> to vector<1x4xf32>
    %29 = vector.broadcast %27 : vector<3x1xf32> to vector<3x4xf32>
    %30 = vector.broadcast %28 : vector<1x4xf32> to vector<3x4xf32>
    %31 = arith.mulf %29, %30 : vector<3x4xf32>
    %32 = arith.addf %26, %31 : vector<3x4xf32>
    %33 = vector.extract_strided_slice %21 {offsets = [0, 2], sizes = [3, 1], strides = [1, 1]} : vector<3x3xf32> to vector<3x1xf32>
    %34 = vector.extract_strided_slice %3 {offsets = [2, 0], sizes = [1, 4], strides = [1, 1]} : vector<3x4xf32> to vector<1x4xf32>
    %35 = vector.broadcast %33 : vector<3x1xf32> to vector<3x4xf32>
    %36 = vector.broadcast %34 : vector<1x4xf32> to vector<3x4xf32>
    %37 = arith.mulf %35, %36 : vector<3x4xf32>
    %38 = arith.addf %32, %37 : vector<3x4xf32>
    %39 = vector.broadcast %4 : vector<1x4xf32> to vector<3x4xf32>
    %40 = arith.addf %38, %39 : vector<3x4xf32>
    %c0_3 = arith.constant 0 : index
    %c0_4 = arith.constant 0 : index
    %41 = vector.load %arg2[%c0_3, %c0_4] : memref<3x4xf32, #tpu.memory_space<vmem>>, vector<3x4xf32>
    tpu.vector_store %arg2[%c0_3, %c0_4], %40 {strides = array<i32>} : memref<3x4xf32, #tpu.memory_space<vmem>>, vector<3x4xf32>,
    return
  }
}

</mosaic_0001>

<llo_original>
// kernel: net_forward.1
$region0: #{net_forward.1}
  #allocation0 [shape = 'u32[]', space=smem, size = 0x4, offset = 0x4, fixed_abs, tag = 'smem constant byte address 0x4 - core index']
  #allocation1 [shape = 'u32[144,128]{1,0:T(1,128)}', space=vmem, size = 0x12000, scoped, tag = 'internal scratch']
  %s0 = inlined_call_operand.hbm [shape: f32[8,128], index: 0, kind: input, shape index: {}]
  %s1 = inlined_call_operand.hbm [shape: f32[3,3], index: 1, kind: input, shape index: {}]
  %s2 = inlined_call_operand.hbm [shape: f32[3,4], index: 2, kind: output, shape index: {}]
  %s3 = sld [smem:[#allocation0]]
  $region26: #{net_forward.1} parent=0
    _
  %s5 = ssub.s32 1, %s3
  %s6 = scalar_select 0, %s5, %s3
  $region1: #{net_forward.1} parent=0
    #allocation2 [shape = 'u8[4096]{0}', space=vmem, size = 0x1000, scoped, tag = 'input window, operand 0, single buffered']
    #allocation3 [shape = 's32[1]{0}', space=sflag, size = 0x4, scoped, tag = 'scoped memory for net_forward.1']
    #allocation4 [shape = 's32[1]{0}', space=sflag, size = 0x4, scoped, tag = 'scoped memory for net_forward.1']
    #allocation5 [shape = 'u8[2048]{0}', space=vmem, size = 0x800, scoped, tag = 'input window, operand 1, single buffered']
    #allocation6 [shape = 's32[1]{0}', space=sflag, size = 0x4, scoped, tag = 'scoped memory for net_forward.1']
    #allocation7 [shape = 'u8[2048]{0}', space=vmem, size = 0x800, scoped, tag = 'output window, operand 0, single buffered']
    %7 = vsyncpa [#allocation3], 0
    %8 = vsyncpa [#allocation6], 0
    %9 = vsyncpa [#allocation4], 0
    // Predicated region
    $region2: #{net_forward.1} parent=1 // pred_check
      _
    $region3: #{net_forward.1} parent=1 // pred_check_branch
      %11 = sbr.rel (0) target = $region5
    $region4: #{net_forward.1} parent=1 // pred_region
      %s13 = ssub.s32 128, 128
      %14 = vsyncadd [#allocation3], %s13
      %s16 = sshll.u32 [#allocation2], 4
      %s17 = int_to_ptr.vmem [resolvable:$true] %s16
      %19 = dma.hbm_to_vmem [thread:$0]  %s0, 128, %s17, [#allocation3]
    $region5: #{net_forward.1} parent=1 // pred_fallthru
      _
    // Predicated region
    $region6: #{net_forward.1} parent=1 // pred_check
      _
    $region7: #{net_forward.1} parent=1 // pred_check_branch
      %21 = sbr.rel (0) target = $region9
    $region8: #{net_forward.1} parent=1 // pred_region
      %s23 = ssub.s32 64, 64
      %24 = vsyncadd [#allocation6], %s23
      %s26 = sshll.u32 [#allocation5], 4
      %s27 = int_to_ptr.vmem [resolvable:$true] %s26
      %29 = dma.hbm_to_vmem [thread:$0]  %s1, 64, %s27, [#allocation6]
    $region9: #{net_forward.1} parent=1 // pred_fallthru
      _
    // Predicated region
    $region10: #{net_forward.1} parent=1 // pred_check
      _
    $region11: #{net_forward.1} parent=1 // pred_check_branch
      %31 = sbr.rel (0) target = $region13
    $region12: #{net_forward.1} parent=1 // pred_region
      %32 = dma.done [#allocation3], 128
    $region13: #{net_forward.1} parent=1 // pred_fallthru
      _
    // Predicated region
    $region14: #{net_forward.1} parent=1 // pred_check
      _
    $region15: #{net_forward.1} parent=1 // pred_check_branch
      %34 = sbr.rel (0) target = $region17
    $region16: #{net_forward.1} parent=1 // pred_region
      %35 = dma.done [#allocation6], 64
    $region17: #{net_forward.1} parent=1 // pred_fallthru
      _
    %v36 = vld [vmem:[#allocation2] sm:$0xff]
    %v37 = vld [vmem:[#allocation5] sm:$0x7]
    %39 = vset.pattern.permute.xlu0 0
    %40 = vperm.xlu0 %39, %v36
    %v41 = vpop.permute.xlu0 %40
    %v43 = vlaneseq
    %v44 = vshrl.u32 %v43, 7
    %v45 = vsub.s32 0, %v44
    %v46 = vrot.slane %v37, %v45
    %v47 = vmul.f32 %v41, %v46
    %48 = vset.pattern.permute.xlu0 1
    %49 = vperm.xlu0 %48, %v36
    %v50 = vpop.permute.xlu0 %49
    %v52 = vlaneseq
    %v53 = vshrl.u32 %v52, 7
    %v54 = vsub.s32 1, %v53
    %v55 = vrot.slane %v37, %v54
    %v56 = vmul.f32 %v50, %v55
    %v57 = vadd.f32 %v47, %v56
    %58 = vset.pattern.permute.xlu0 2
    %59 = vperm.xlu0 %58, %v36
    %v60 = vpop.permute.xlu0 %59
    %v62 = vlaneseq
    %v63 = vshrl.u32 %v62, 7
    %v64 = vsub.s32 2, %v63
    %v65 = vrot.slane %v37, %v64
    %v66 = vmul.f32 %v60, %v65
    %v67 = vadd.f32 %v57, %v66
    %69 = vset.pattern.permute.xlu0 0
    %70 = vperm.xlu0 %69, %v67
    %v71 = vpop.permute.xlu0 %70
    %v73 = vlaneseq
    %v74 = vshrl.u32 %v73, 7
    %v75 = vsub.s32 0, %v74
    %v76 = vrot.slane %v36, %v75
    %v77 = vmul.f32 %v71, %v76
    %78 = vset.pattern.permute.xlu0 1
    %79 = vperm.xlu0 %78, %v67
    %v80 = vpop.permute.xlu0 %79
    %v82 = vlaneseq
    %v83 = vshrl.u32 %v82, 7
    %v84 = vsub.s32 1, %v83
    %v85 = vrot.slane %v36, %v84
    %v86 = vmul.f32 %v80, %v85
    %v87 = vadd.f32 %v77, %v86
    %88 = vset.pattern.permute.xlu0 2
    %89 = vperm.xlu0 %88, %v67
    %v90 = vpop.permute.xlu0 %89
    %v92 = vlaneseq
    %v93 = vshrl.u32 %v92, 7
    %v94 = vsub.s32 2, %v93
    %v95 = vrot.slane %v36, %v94
    %v96 = vmul.f32 %v90, %v95
    %v97 = vadd.f32 %v87, %v96
    %v98 = vlaneseq
    %v99 = vshrl.u32 %v98, 7
    %v100 = vsub.s32 3, %v99
    %v101 = vrot.slane %v36, %v100
    %103 = vrot.lane.b32.xlu0 %v101, 8
    %v104 = vpop.permute.xlu0 %103
    %v106 = vadd.f32 %v97, %v104
    %108 = vrot.lane.b32.xlu0 %v106, 120
    %v109 = vpop.permute.xlu0 %108
    %vm111 = vcmask 26624
    %112 = vst.msk [vmem:[#allocation7] sm:$0x7] %vm111, %v109
    // Predicated region
    $region18: #{net_forward.1} parent=1 // pred_check
      _
    $region19: #{net_forward.1} parent=1 // pred_check_branch
      %114 = sbr.rel (0) target = $region21
    $region20: #{net_forward.1} parent=1 // pred_region
      %s116 = ssub.s32 64, 64
      %117 = vsyncadd [#allocation4], %s116
      %s119 = sshll.u32 [#allocation7], 4
      %s120 = int_to_ptr.vmem [resolvable:$true] %s119
      %122 = dma.vmem_to_hbm [thread:$0]  %s120, 64, %s2, [#allocation4]
    $region21: #{net_forward.1} parent=1 // pred_fallthru
      _
    // Predicated region
    $region22: #{net_forward.1} parent=1 // pred_check
      _
    $region23: #{net_forward.1} parent=1 // pred_check_branch
      %124 = sbr.rel (0) target = $region25
    $region24: #{net_forward.1} parent=1 // pred_region
      %125 = dma.done [#allocation4], 64
    $region25: #{net_forward.1} parent=1 // pred_fallthru
      _
    %126 = vsyncpa [#allocation3], 1
    %127 = vsyncpa [#allocation6], 1
    %128 = vsyncpa [#allocation4], 1

</llo_original>
